<compile_context>
chip_gen: v7x
topology: tpu7x:2x2x1
jax: 0.10.0
libtpu: 0.0.40
codegen_flags: <defaults>
</compile_context>

<pallas_src>
import jax
import jax.numpy as jnp
from jax.experimental import pallas as pl
from jax.experimental.pallas import tpu as pltpu

TOKEN_DIM = 128          # small, lane-aligned stand-in for the default 1024
ROWS_PER_GROUP = 4       # the module always views its input as (4, token_dim)
MAX_TILE_M = 512         # cap on rows per block for the batched path


def _round_up(x, m):
    return ((x + m - 1) // m) * m


# ----------------------------- kernels --------------------------------------

def _qlocal_kernel(x_ref, w_ref, b_ref, o_ref):
    # (tile_m, D) @ (D, tile_n) on the MXU, f32 accumulate, f32 bias add,
    # cast to the (bf16) output dtype only on the final store.
    acc = jnp.dot(x_ref[...], w_ref[...], preferred_element_type=jnp.float32)
    o_ref[...] = (acc + b_ref[...]).astype(o_ref.dtype)


def _qlocal_kernel_quant(x_ref, w_ref, s_ref, b_ref, o_ref):
    # int8 weight tile -> bf16 (exact for |q| <= 127), MXU matmul, then apply
    # the per-output-channel scale together with the bias in f32.
    w = w_ref[...].astype(x_ref.dtype)
    acc = jnp.dot(x_ref[...], w, preferred_element_type=jnp.float32)
    o_ref[...] = (acc * s_ref[...] + b_ref[...]).astype(o_ref.dtype)


# --------------------------- parameter prep ---------------------------------

def prepare_qlocal_params(weight, bias, *, weight_dtype=jnp.bfloat16):
    """One-time parameter prep (call at init, NOT per forward).

    weight: (4*D, D) nn.Linear layout -> pre-transposed (D, 4*D) in weight_dtype
    bias  : (4*D,)                     -> (1, 4*D) f32
    Returns (w_t, scale_or_None, bias_row).
    """
    w_t = jnp.asarray(weight, jnp.float32).T             # (D, 4D)
    b = jnp.reshape(jnp.asarray(bias, jnp.float32), (1, -1))
    if weight_dtype == jnp.int8:
        # Symmetric per-output-channel int8 quantization.
        amax = jnp.max(jnp.abs(w_t), axis=0, keepdims=True)          # (1, 4D)
        scale = jnp.where(amax > 0, amax / 127.0, 1.0).astype(jnp.float32)
        w_q = jnp.clip(jnp.round(w_t / scale), -127, 127).astype(jnp.int8)
        return w_q, scale, b
    return w_t.astype(weight_dtype), None, b


# ------------------------------ launcher ------------------------------------

def _qlocal_matmul(x_2d, w_t, scale, b, token_dim, *, tile_n=None, tile_m=None,
                   compute_dtype=jnp.bfloat16, out_dtype=jnp.bfloat16):
    """x_2d (M, D) @ w_t (D, 4D) (+ scale) + b -> (M, 4D) in out_dtype."""
    m = x_2d.shape[0]
    n_out = 4 * token_dim
    assert w_t.shape == (token_dim, n_out)
    assert b.shape == (1, n_out)

    w_itemsize = jnp.dtype(w_t.dtype).itemsize
    x_itemsize = jnp.dtype(compute_dtype).itemsize
    o_itemsize = jnp.dtype(out_dtype).itemsize

    # --- N tiling: don't tile small weights (per-step overhead would dominate
    # this pure-DMA kernel); otherwise stream ~2 MiB weight tiles.
    if tile_n is None:
        w_bytes = token_dim * n_out * w_itemsize
        if w_bytes < (4 << 20) or n_out % 128 != 0:
            tile_n = n_out
        else:
            target = max(128, ((2 << 20) // (token_dim * w_itemsize)) // 128 * 128)
            tile_n, t = 128, 128
            while t <= target:
                if n_out % t == 0:
                    tile_n = t
                t += 128
    assert n_out % tile_n == 0 and (tile_n % 128 == 0 or tile_n == n_out)
    n_tiles = n_out // tile_n

    # --- M tiling: pad to the compute dtype's sublane pack (16 for bf16),
    # cap rows per block so the batched path never blows scoped VMEM.
    sub = {1: 32, 2: 16, 4: 8}.get(x_itemsize, 8)
    m_align = _round_up(m, sub)
    if tile_m is None:
        num_m = pl.cdiv(m_align, MAX_TILE_M)
        tile_m = _round_up(pl.cdiv(m_align, num_m), sub)
    assert tile_m % sub == 0
    m_tiles = pl.cdiv(m, tile_m)
    m_pad = m_tiles * tile_m

    x_c = x_2d.astype(compute_dtype)
    x_p = jnp.pad(x_c, ((0, m_pad - m), (0, 0))) if m_pad != m else x_c

    # Grid: N outermost ("parallel" -> split across TensorCores so each TC
    # streams half the weight), M innermost ("arbitrary") so each weight tile
    # is DMA'd once per N tile and stays resident across the whole M loop.
    grid = (n_tiles, m_tiles)

    in_specs = [
        pl.BlockSpec((tile_m, token_dim), lambda j, i: (i, 0)),   # activations
        pl.BlockSpec((token_dim, tile_n), lambda j, i: (0, j)),   # weight
    ]
    args = [x_p, w_t]
    if scale is not None:
        in_specs.append(pl.BlockSpec((1, tile_n), lambda j, i: (0, j)))
        args.append(scale)
    in_specs.append(pl.BlockSpec((1, tile_n), lambda j, i: (0, j)))  # bias
    args.append(b)

    kernel = _qlocal_kernel_quant if scale is not None else _qlocal_kernel

    # Explicit VMEM budget from actual tile sizes (v7x: 32 MiB scoped default,
    # 64 MiB physical; v5e scoped default is only 16 MiB).
    live = 2 * (tile_m * token_dim * x_itemsize
                + token_dim * tile_n * w_itemsize
                + tile_m * tile_n * o_itemsize) + 4 * (8 * tile_n * 4)
    vmem_limit = int(min(max(2 * live, 32 << 20), 64 << 20))

    cost = pl.CostEstimate(
        flops=2 * m_pad * token_dim * n_out,
        transcendentals=0,
        bytes_accessed=(m_pad * token_dim * x_itemsize          # activations
                        + token_dim * n_out * w_itemsize        # weight
                        + n_out * 4 * (2 if scale is not None else 1)
                        + m_pad * n_out * o_itemsize))          # output

    out = pl.pallas_call(
        kernel,
        out_shape=jax.ShapeDtypeStruct((m_pad, n_out), out_dtype),
        grid=grid,
        in_specs=in_specs,
        out_specs=pl.BlockSpec((tile_m, tile_n), lambda j, i: (i, j)),
        compiler_params=pltpu.CompilerParams(
            dimension_semantics=("parallel", "arbitrary"),
            vmem_limit_bytes=vmem_limit),
        cost_estimate=cost,
    )(*args)

    return out[:m, :]


# ------------------------------ forwards ------------------------------------

def qlocal_forward(x, params, token_dim=TOKEN_DIM, **kw):
    """Matches Qlocal.forward: x is a list of tensors (or a (4, D) array).

    Returns (16, token_dim) in the kernel's output dtype (bf16 by default).
    """
    w_t, scale, b = params
    if isinstance(x, (list, tuple)):
        # Glue for torch.cat(x, dim=0).view(4, D).
        x = jnp.concatenate([jnp.reshape(t, (-1,)) for t in x], axis=0)
    x = jnp.reshape(x, (ROWS_PER_GROUP, token_dim))
    out = _qlocal_matmul(x, w_t, scale, b, token_dim, **kw)
    return jnp.reshape(out, (-1, token_dim))                 # (16, D)


def qlocal_forward_batched(x_groups, params, token_dim=TOKEN_DIM, **kw):
    """Process B Qlocal groups in ONE kernel launch.

    x_groups: (B, 4, token_dim) -> (B, 16, token_dim); amortizes the weight DMA
    and launch overhead across all B groups (M-tiled, weight stays resident).
    """
    w_t, scale, b = params
    bsz = x_groups.shape[0]
    x_2d = jnp.reshape(x_groups, (bsz * ROWS_PER_GROUP, token_dim))
    out = _qlocal_matmul(x_2d, w_t, scale, b, token_dim, **kw)     # (4B, 4D)
    return jnp.reshape(out, (bsz, 4 * ROWS_PER_GROUP, token_dim))


# -------------------------------- test --------------------------------------

if __name__ == "__main__":
    key = jax.random.PRNGKey(0)
    k_x, k_w, k_b, k_xb = jax.random.split(key, 4)
    TD = TOKEN_DIM

    # Input per the module: a list of 4 token tensors -> cat -> (4, TD).
    x_full = jax.random.normal(k_x, (ROWS_PER_GROUP, 1, TD), dtype=jnp.float32)
    x_list = [x_full[i] for i in range(ROWS_PER_GROUP)]

    # nn.Linear parameters: W (4D, D), b (4D,)
    weight = jax.random.normal(k_w, (4 * TD, TD), dtype=jnp.float32) * 0.02
    bias = jax.random.normal(k_b, (4 * TD,), dtype=jnp.float32) * 0.01

    # References.
    x_mat = jnp.reshape(
        jnp.concatenate([jnp.reshape(t, (-1,)) for t in x_list]),
        (ROWS_PER_GROUP, TD))
    x_bf = x_mat.astype(jnp.bfloat16).astype(jnp.float32)
    w_bf = weight.astype(jnp.bfloat16).astype(jnp.float32)
    ref_bf = jnp.reshape(x_bf @ w_bf.T + bias, (-1, TD))
    ref_f32 = jnp.reshape(x_mat @ weight.T + bias, (-1, TD))

    # --- bf16-weight path (single group, module semantics) ---
    params = prepare_qlocal_params(weight, bias)
    out = jax.block_until_ready(qlocal_forward(x_list, params, token_dim=TD))
    assert out.shape == (4 * ROWS_PER_GROUP, TD), out.shape
    assert out.dtype == jnp.bfloat16, out.dtype
    out_f = out.astype(jnp.float32)
    assert jnp.allclose(out_f, ref_bf, atol=2e-2, rtol=2e-2), \
        float(jnp.max(jnp.abs(out_f - ref_bf)))
    assert jnp.allclose(out_f, ref_f32, atol=6e-2, rtol=6e-2)

    # --- int8-weight path (v5e/v6e HBM-byte saver) ---
    params_q = prepare_qlocal_params(weight, bias, weight_dtype=jnp.int8)
    out_q = jax.block_until_ready(qlocal_forward(x_list, params_q, token_dim=TD))
    assert jnp.allclose(out_q.astype(jnp.float32), ref_f32, atol=6e-2, rtol=6e-2)

    # --- batched path, forcing a 2-D (N, M) grid to exercise M/N tiling ---
    B = 8
    xb = jax.random.normal(k_xb, (B, ROWS_PER_GROUP, TD), dtype=jnp.float32)
    out_b = jax.block_until_ready(
        qlocal_forward_batched(xb, params, token_dim=TD, tile_m=16, tile_n=128))
    xb_bf = xb.astype(jnp.bfloat16).astype(jnp.float32).reshape(-1, TD)
    ref_b = jnp.reshape(xb_bf @ w_bf.T + bias, (B, 4 * ROWS_PER_GROUP, TD))
    assert out_b.shape == (B, 4 * ROWS_PER_GROUP, TD), out_b.shape
    assert jnp.allclose(out_b.astype(jnp.float32), ref_b, atol=2e-2, rtol=2e-2)

    print("KERNEL_OK")
</pallas_src>

<mosaic_0001>
module attributes {stable_mosaic.version = 11 : i64} {
  func.func @_qlocal_kernel(%arg0: i32, %arg1: i32, %arg2: memref<16x128xbf16, #tpu.memory_space<vmem>>, %arg3: memref<128x512xbf16, #tpu.memory_space<vmem>>, %arg4: memref<1x512xf32, #tpu.memory_space<vmem>>, %arg5: memref<16x512xbf16, #tpu.memory_space<vmem>>) attributes {dimension_semantics = [#tpu.dimension_semantics<parallel>, #tpu.dimension_semantics<arbitrary>], iteration_bounds = array<i64: 1, 1>, scalar_prefetch = 0 : i64, scratch_operands = 0 : i64, tpu.core_type = #tpu.core_type<tc>, window_params = [{transform_indices = @transform_0, window_bounds = array<i64: 16, 128>}, {transform_indices = @transform_1, window_bounds = array<i64: 128, 512>}, {transform_indices = @transform_2, window_bounds = array<i64: 1, 512>}, {transform_indices = @transform_3, window_bounds = array<i64: 16, 512>}]} {
    %c0 = arith.constant 0 : index
    %c0_0 = arith.constant 0 : index
    %0 = vector.load %arg2[%c0, %c0_0] : memref<16x128xbf16, #tpu.memory_space<vmem>>, vector<16x128xbf16>
    %c0_1 = arith.constant 0 : index
    %c0_2 = arith.constant 0 : index
    %1 = vector.load %arg3[%c0_1, %c0_2] : memref<128x512xbf16, #tpu.memory_space<vmem>>, vector<128x512xbf16>
    %cst = arith.constant dense<0.000000e+00> : vector<16x512xf32>
    %2 = tpu.matmul %0, %1, %cst {dimension_numbers = #tpu.dot_dimension_numbers<[1], [0], [0], [1], [0, 0, 1, 1], [], []>} : vector<16x128xbf16>, vector<128x512xbf16>, vector<16x512xf32> -> vector<16x512xf32>
    %c0_3 = arith.constant 0 : index
    %c0_4 = arith.constant 0 : index
    %3 = vector.load %arg4[%c0_3, %c0_4] : memref<1x512xf32, #tpu.memory_space<vmem>>, vector<1x512xf32>
    %4 = vector.broadcast %3 : vector<1x512xf32> to vector<16x512xf32>
    %5 = arith.addf %2, %4 : vector<16x512xf32>
    %6 = arith.truncf %5 : vector<16x512xf32> to vector<16x512xbf16>
    %c0_5 = arith.constant 0 : index
    %c0_6 = arith.constant 0 : index
    %7 = vector.load %arg5[%c0_5, %c0_6] : memref<16x512xbf16, #tpu.memory_space<vmem>>, vector<16x512xbf16>
    tpu.vector_store %arg5[%c0_5, %c0_6], %6 {strides = array<i32>} : memref<16x512xbf16, #tpu.memory_space<vmem>>, vector<16x512xbf16>,
    return
  }
  func.func @transform_0(%arg0: i32, %arg1: i32) -> (i32, i32) {
    %c0_i32 = arith.constant 0 : i32
    %c0_i32_0 = arith.constant 0 : i32
    return %arg1, %c0_i32 : i32, i32
  }
  func.func @transform_1(%arg0: i32, %arg1: i32) -> (i32, i32) {
    %c0_i32 = arith.constant 0 : i32
    %c0_i32_0 = arith.constant 0 : i32
    return %c0_i32, %arg0 : i32, i32
  }
  func.func @transform_2(%arg0: i32, %arg1: i32) -> (i32, i32) {
    %c0_i32 = arith.constant 0 : i32
    %c0_i32_0 = arith.constant 0 : i32
    return %c0_i32, %arg0 : i32, i32
  }
  func.func @transform_3(%arg0: i32, %arg1: i32) -> (i32, i32) {
    %c0_i32 = arith.constant 0 : i32
    return %arg1, %arg0 : i32, i32
  }
}

</mosaic_0001>

<llo_original>
// kernel: tpu_custom_call.1
$region0: #{tpu_custom_call.1}
  #allocation0 [shape = 'u32[]', space=smem, size = 0x4, offset = 0x4, fixed_abs, tag = 'smem constant byte address 0x4 - core index']
  #allocation1 [shape = 'u32[144,128]{1,0:T(1,128)}', space=vmem, size = 0x12000, scoped, tag = 'internal scratch']
  %s0 = inlined_call_operand.hbm [shape: bf16[16,128], index: 0, kind: input, shape index: {}]
  %s1 = inlined_call_operand.hbm [shape: bf16[128,512], index: 1, kind: input, shape index: {}]
  %s2 = inlined_call_operand.vmem [shape: f32[1,512], index: 2, kind: input, shape index: {}]
  %s3 = inlined_call_operand.hbm [shape: bf16[16,512], index: 3, kind: output, shape index: {}]
  %s4 = sld [smem:[#allocation0]]
  $region30: #{tpu_custom_call.1} parent=0
    _
  %s6 = ssub.s32 1, %s4
  %s7 = scalar_select 0, %s6, %s4
  $region1: #{tpu_custom_call.1} parent=0
    #allocation2 [shape = 'u8[4096]{0}', space=vmem, size = 0x1000, scoped, tag = 'input window, operand 0, single buffered']
    #allocation3 [shape = 's32[1]{0}', space=sflag, size = 0x4, scoped, tag = 'scoped memory for tpu_custom_call.1']
    #allocation4 [shape = 's32[1]{0}', space=sflag, size = 0x4, scoped, tag = 'scoped memory for tpu_custom_call.1']
    #allocation5 [shape = 'u8[131072]{0}', space=vmem, size = 0x20000, scoped, tag = 'input window, operand 1, single buffered']
    #allocation6 [shape = 's32[1]{0}', space=sflag, size = 0x4, scoped, tag = 'scoped memory for tpu_custom_call.1']
    #allocation7 [shape = 'u8[16384]{0}', space=vmem, size = 0x4000, scoped, tag = 'output window, operand 0, single buffered']
    %8 = vsyncpa [#allocation3], 0
    %9 = vsyncpa [#allocation6], 0
    %10 = vsyncpa [#allocation4], 0
    // Predicated region
    $region2: #{tpu_custom_call.1} parent=1 // pred_check
      _
    $region3: #{tpu_custom_call.1} parent=1 // pred_check_branch
      %12 = sbr.rel (0) target = $region5
    $region4: #{tpu_custom_call.1} parent=1 // pred_region
      %s14 = ssub.s32 128, 128
      %15 = vsyncadd [#allocation3], %s14
      %s16 = sshll.u32 [#allocation2], 4
      %s17 = int_to_ptr.vmem [resolvable:$true] %s16
      %22 = dma.hbm_to_vmem [thread:$0]  %s0, 128, %s17, [#allocation3], 64, 64, 4
    $region5: #{tpu_custom_call.1} parent=1 // pred_fallthru
      _
    // Predicated region
    $region6: #{tpu_custom_call.1} parent=1 // pred_check
      _
    $region7: #{tpu_custom_call.1} parent=1 // pred_check_branch
      %24 = sbr.rel (0) target = $region9
    $region8: #{tpu_custom_call.1} parent=1 // pred_region
      %s26 = ssub.s32 4096, 4096
      %27 = vsyncadd [#allocation6], %s26
      %s28 = sshll.u32 [#allocation5], 4
      %s29 = int_to_ptr.vmem [resolvable:$true] %s28
      %34 = dma.hbm_to_vmem [thread:$0]  %s1, 4096, %s29, [#allocation6], 256, 256, 16
    $region9: #{tpu_custom_call.1} parent=1 // pred_fallthru
      _
    // Predicated region
    $region10: #{tpu_custom_call.1} parent=1 // pred_check
      _
    $region11: #{tpu_custom_call.1} parent=1 // pred_check_branch
      %36 = sbr.rel (0) target = $region13
    $region12: #{tpu_custom_call.1} parent=1 // pred_region
      _
    $region13: #{tpu_custom_call.1} parent=1 // pred_fallthru
      _
    // Predicated region
    $region14: #{tpu_custom_call.1} parent=1 // pred_check
      _
    $region15: #{tpu_custom_call.1} parent=1 // pred_check_branch
      %38 = sbr.rel (0) target = $region17
    $region16: #{tpu_custom_call.1} parent=1 // pred_region
      %39 = dma.done [#allocation3], 128
    $region17: #{tpu_custom_call.1} parent=1 // pred_fallthru
      _
    // Predicated region
    $region18: #{tpu_custom_call.1} parent=1 // pred_check
      _
    $region19: #{tpu_custom_call.1} parent=1 // pred_check_branch
      %41 = sbr.rel (0) target = $region21
    $region20: #{tpu_custom_call.1} parent=1 // pred_region
      %42 = dma.done [#allocation6], 4096
    $region21: #{tpu_custom_call.1} parent=1 // pred_fallthru
      _
    %v44 = vld [vmem:[#allocation2] sm:$0xf]
    %v45 = vld [vmem:[#allocation2 + $0x4] sm:$0xf]
    %v46 = vld [vmem:[#allocation5] sm:$0xff]
    %v47 = vld [vmem:[#allocation5 + $0x8] sm:$0xff]
    %v48 = vld [vmem:[#allocation5 + $0x10] sm:$0xff]
    %v49 = vld [vmem:[#allocation5 + $0x18] sm:$0xff]
    %v50 = vld [vmem:[#allocation5 + $0x20] sm:$0xff]
    %v51 = vld [vmem:[#allocation5 + $0x28] sm:$0xff]
    %v52 = vld [vmem:[#allocation5 + $0x30] sm:$0xff]
    %v53 = vld [vmem:[#allocation5 + $0x38] sm:$0xff]
    %v54 = vld [vmem:[#allocation5 + $0x40] sm:$0xff]
    %v55 = vld [vmem:[#allocation5 + $0x48] sm:$0xff]
    %v56 = vld [vmem:[#allocation5 + $0x50] sm:$0xff]
    %v57 = vld [vmem:[#allocation5 + $0x58] sm:$0xff]
    %v58 = vld [vmem:[#allocation5 + $0x60] sm:$0xff]
    %v59 = vld [vmem:[#allocation5 + $0x68] sm:$0xff]
    %v60 = vld [vmem:[#allocation5 + $0x70] sm:$0xff]
    %v61 = vld [vmem:[#allocation5 + $0x78] sm:$0xff]
    %v62 = vld [vmem:[#allocation5 + $0x80] sm:$0xff]
    %v63 = vld [vmem:[#allocation5 + $0x88] sm:$0xff]
    %v64 = vld [vmem:[#allocation5 + $0x90] sm:$0xff]
    %v65 = vld [vmem:[#allocation5 + $0x98] sm:$0xff]
    %v66 = vld [vmem:[#allocation5 + $0xa0] sm:$0xff]
    %v67 = vld [vmem:[#allocation5 + $0xa8] sm:$0xff]
    %v68 = vld [vmem:[#allocation5 + $0xb0] sm:$0xff]
    %v69 = vld [vmem:[#allocation5 + $0xb8] sm:$0xff]
    %v70 = vld [vmem:[#allocation5 + $0xc0] sm:$0xff]
    %v71 = vld [vmem:[#allocation5 + $0xc8] sm:$0xff]
    %v72 = vld [vmem:[#allocation5 + $0xd0] sm:$0xff]
    %v73 = vld [vmem:[#allocation5 + $0xd8] sm:$0xff]
    %v74 = vld [vmem:[#allocation5 + $0xe0] sm:$0xff]
    %v75 = vld [vmem:[#allocation5 + $0xe8] sm:$0xff]
    %v76 = vld [vmem:[#allocation5 + $0xf0] sm:$0xff]
    %v77 = vld [vmem:[#allocation5 + $0xf8] sm:$0xff]
    %v78 = vld [vmem:[%s2] sm:$0xf]
    %v80 = vlaneseq
    %v81 = vshrl.u32 %v80, 7
    %v82 = vsub.s32 0, %v81
    %v83 = vrot.slane %v78, %v82
    %v84 = vlaneseq
    %v85 = vshrl.u32 %v84, 7
    %v86 = vsub.s32 1, %v85
    %v87 = vrot.slane %v78, %v86
    %v88 = vlaneseq
    %v89 = vshrl.u32 %v88, 7
    %v90 = vsub.s32 2, %v89
    %v91 = vrot.slane %v78, %v90
    %v92 = vlaneseq
    %v93 = vshrl.u32 %v92, 7
    %v94 = vsub.s32 3, %v93
    %v95 = vrot.slane %v78, %v94
    %v102 = vunpack.c.l.b16 %v44
    %v103 = vunpack.c.l.b16 %v45
    %v104 = vpack.c.b16 %v103, %v102
    %v138 = vunpack.c.l.b16 %v46
    %v139 = vunpack.c.h.b16 %v46
    %v140 = vunpack.c.l.b16 %v47
    %v141 = vunpack.c.h.b16 %v47
    %v142 = vunpack.c.l.b16 %v48
    %v143 = vunpack.c.h.b16 %v48
    %v144 = vunpack.c.l.b16 %v49
    %v145 = vunpack.c.h.b16 %v49
    %v146 = vunpack.c.l.b16 %v50
    %v147 = vunpack.c.h.b16 %v50
    %v148 = vunpack.c.l.b16 %v51
    %v149 = vunpack.c.h.b16 %v51
    %v150 = vunpack.c.l.b16 %v52
    %v151 = vunpack.c.h.b16 %v52
    %v152 = vunpack.c.l.b16 %v53
    %v153 = vunpack.c.h.b16 %v53
    %v154 = vunpack.c.l.b16 %v54
    %v155 = vunpack.c.h.b16 %v54
    %v156 = vunpack.c.l.b16 %v55
    %v157 = vunpack.c.h.b16 %v55
    %v158 = vunpack.c.l.b16 %v56
    %v159 = vunpack.c.h.b16 %v56
    %v160 = vunpack.c.l.b16 %v57
    %v161 = vunpack.c.h.b16 %v57
    %v162 = vunpack.c.l.b16 %v58
    %v163 = vunpack.c.h.b16 %v58
    %v164 = vunpack.c.l.b16 %v59
    %v165 = vunpack.c.h.b16 %v59
    %v166 = vunpack.c.l.b16 %v60
    %v167 = vunpack.c.h.b16 %v60
    %v168 = vunpack.c.l.b16 %v61
    %v169 = vunpack.c.h.b16 %v61
    %v170 = vunpack.c.l.b16 %v62
    %v171 = vunpack.c.h.b16 %v62
    %v172 = vunpack.c.l.b16 %v63
    %v173 = vunpack.c.h.b16 %v63
    %v174 = vunpack.c.l.b16 %v64
    %v175 = vunpack.c.h.b16 %v64
    %v176 = vunpack.c.l.b16 %v65
    %v177 = vunpack.c.h.b16 %v65
    %v178 = vunpack.c.l.b16 %v66
    %v179 = vunpack.c.h.b16 %v66
    %v180 = vunpack.c.l.b16 %v67
    %v181 = vunpack.c.h.b16 %v67
    %v182 = vunpack.c.l.b16 %v68
    %v183 = vunpack.c.h.b16 %v68
    %v184 = vunpack.c.l.b16 %v69
    %v185 = vunpack.c.h.b16 %v69
    %v186 = vunpack.c.l.b16 %v70
    %v187 = vunpack.c.h.b16 %v70
    %v188 = vunpack.c.l.b16 %v71
    %v189 = vunpack.c.h.b16 %v71
    %v190 = vunpack.c.l.b16 %v72
    %v191 = vunpack.c.h.b16 %v72
    %v192 = vunpack.c.l.b16 %v73
    %v193 = vunpack.c.h.b16 %v73
    %v194 = vunpack.c.l.b16 %v74
    %v195 = vunpack.c.h.b16 %v74
    %v196 = vunpack.c.l.b16 %v75
    %v197 = vunpack.c.h.b16 %v75
    %v198 = vunpack.c.l.b16 %v76
    %v199 = vunpack.c.h.b16 %v76
    %v200 = vunpack.c.l.b16 %v77
    %v201 = vunpack.c.h.b16 %v77
    %v202 = vpack.c.b16 %v142, %v138
    %v203 = vpack.c.b16 %v143, %v139
    %v204 = vpack.c.b16 %v144, %v140
    %v205 = vpack.c.b16 %v145, %v141
    %v206 = vpack.c.b16 %v150, %v146
    %v207 = vpack.c.b16 %v151, %v147
    %v208 = vpack.c.b16 %v152, %v148
    %v209 = vpack.c.b16 %v153, %v149
    %v210 = vpack.c.b16 %v158, %v154
    %v211 = vpack.c.b16 %v159, %v155
    %v212 = vpack.c.b16 %v160, %v156
    %v213 = vpack.c.b16 %v161, %v157
    %v214 = vpack.c.b16 %v166, %v162
    %v215 = vpack.c.b16 %v167, %v163
    %v216 = vpack.c.b16 %v168, %v164
    %v217 = vpack.c.b16 %v169, %v165
    %v218 = vpack.c.b16 %v174, %v170
    %v219 = vpack.c.b16 %v175, %v171
    %v220 = vpack.c.b16 %v176, %v172
    %v221 = vpack.c.b16 %v177, %v173
    %v222 = vpack.c.b16 %v182, %v178
    %v223 = vpack.c.b16 %v183, %v179
    %v224 = vpack.c.b16 %v184, %v180
    %v225 = vpack.c.b16 %v185, %v181
    %v226 = vpack.c.b16 %v190, %v186
    %v227 = vpack.c.b16 %v191, %v187
    %v228 = vpack.c.b16 %v192, %v188
    %v229 = vpack.c.b16 %v193, %v189
    %v230 = vpack.c.b16 %v198, %v194
    %v231 = vpack.c.b16 %v199, %v195
    %v232 = vpack.c.b16 %v200, %v196
    %v233 = vpack.c.b16 %v201, %v197
    %266 = vmatprep.subr.bf16.mxu0 %v203
    %267 = vmatpush1.bf16.msra.mxu0 %v202
    %268 = vmatprep.subr.bf16.mxu0 %v207
    %269 = vmatpush1.bf16.msra.mxu0 %v206
    %270 = vmatprep.subr.bf16.mxu0 %v211
    %271 = vmatpush1.bf16.msra.mxu0 %v210
    %272 = vmatprep.subr.bf16.mxu0 %v215
    %273 = vmatpush1.bf16.msra.mxu0 %v214
    %274 = vmatprep.subr.bf16.mxu0 %v219
    %275 = vmatpush1.bf16.msra.mxu0 %v218
    %276 = vmatprep.subr.bf16.mxu0 %v223
    %277 = vmatpush1.bf16.msra.mxu0 %v222
    %278 = vmatprep.subr.bf16.mxu0 %v227
    %279 = vmatpush1.bf16.msra.mxu0 %v226
    %280 = vmatprep.subr.bf16.mxu0 %v231
    %281 = vmatpush1.bf16.msra.mxu0 %v230
    %282 = vmatprep.subr.bf16.mxu0 0
    %283 = vmatpush1.bf16.msra.mxu0 0
    %284 = vmatprep.subr.bf16.mxu0 0
    %285 = vmatpush1.bf16.msra.mxu0 0
    %286 = vmatprep.subr.bf16.mxu0 0
    %287 = vmatpush1.bf16.msra.mxu0 0
    %288 = vmatprep.subr.bf16.mxu0 0
    %289 = vmatpush1.bf16.msra.mxu0 0
    %290 = vmatprep.subr.bf16.mxu0 0
    %291 = vmatpush1.bf16.msra.mxu0 0
    %292 = vmatprep.subr.bf16.mxu0 0
    %293 = vmatpush1.bf16.msra.mxu0 0
    %294 = vmatprep.subr.bf16.mxu0 0
    %295 = vmatpush1.bf16.msra.mxu0 0
    %296 = vmatprep.subr.bf16.mxu0 0
    %297 = vmatpush1.bf16.msra.mxu0 0
    %298 = vmatprep.mubr.bf16.mxu0 0
    %299 = vmatmul.mubr.bf16.gmra.mrb[0].mxu0 %v104
    %v300 = vpop.f32.mrb[0].mxu0
    %v301 = vadd.f32 %v83, %v300
    %v302 = vpop.f32.mrb[0].mxu0
    %v303 = vadd.f32 %v87, %v302
    %v304 = vpop.f32.mrb[0].mxu0
    %v305 = vadd.f32 %v83, %v304
    %v306 = vpop.f32.mrb[0].mxu0
    %v307 = vadd.f32 %v87, %v306
    %308 = vdwg.mxu0
    %309 = vmatprep.subr.bf16.mxu0 %v205
    %310 = vmatpush1.bf16.msra.mxu0 %v204
    %311 = vmatprep.subr.bf16.mxu0 %v209
    %312 = vmatpush1.bf16.msra.mxu0 %v208
    %313 = vmatprep.subr.bf16.mxu0 %v213
    %314 = vmatpush1.bf16.msra.mxu0 %v212
    %315 = vmatprep.subr.bf16.mxu0 %v217
    %316 = vmatpush1.bf16.msra.mxu0 %v216
    %317 = vmatprep.subr.bf16.mxu0 %v221
    %318 = vmatpush1.bf16.msra.mxu0 %v220
    %319 = vmatprep.subr.bf16.mxu0 %v225
    %320 = vmatpush1.bf16.msra.mxu0 %v224
    %321 = vmatprep.subr.bf16.mxu0 %v229
    %322 = vmatpush1.bf16.msra.mxu0 %v228
    %323 = vmatprep.subr.bf16.mxu0 %v233
    %324 = vmatpush1.bf16.msra.mxu0 %v232
    %325 = vmatprep.subr.bf16.mxu0 0
    %326 = vmatpush1.bf16.msra.mxu0 0
    %327 = vmatprep.subr.bf16.mxu0 0
    %328 = vmatpush1.bf16.msra.mxu0 0
    %329 = vmatprep.subr.bf16.mxu0 0
    %330 = vmatpush1.bf16.msra.mxu0 0
    %331 = vmatprep.subr.bf16.mxu0 0
    %332 = vmatpush1.bf16.msra.mxu0 0
    %333 = vmatprep.subr.bf16.mxu0 0
    %334 = vmatpush1.bf16.msra.mxu0 0
    %335 = vmatprep.subr.bf16.mxu0 0
    %336 = vmatpush1.bf16.msra.mxu0 0
    %337 = vmatprep.subr.bf16.mxu0 0
    %338 = vmatpush1.bf16.msra.mxu0 0
    %339 = vmatprep.subr.bf16.mxu0 0
    %340 = vmatpush1.bf16.msra.mxu0 0
    %341 = vmatprep.mubr.bf16.mxu0 0
    %342 = vmatmul.mubr.bf16.gmra.mrb[0].mxu0 %v104
    %v343 = vpop.f32.mrb[0].mxu0
    %v344 = vadd.f32 %v91, %v343
    %v345 = vpop.f32.mrb[0].mxu0
    %v346 = vadd.f32 %v95, %v345
    %v347 = vpop.f32.mrb[0].mxu0
    %v348 = vadd.f32 %v91, %v347
    %v349 = vpop.f32.mrb[0].mxu0
    %v350 = vadd.f32 %v95, %v349
    %351 = vdwg.mxu0
    %v352 = vpack.c.bf16 %v305, %v301
    %v353 = vpack.c.bf16 %v307, %v303
    %v354 = vpack.c.bf16 %v348, %v344
    %v355 = vpack.c.bf16 %v350, %v346
    %v360 = vunpack.c.l.b16 %v352
    %v361 = vunpack.c.l.b16 %v353
    %v362 = vunpack.c.l.b16 %v354
    %v363 = vunpack.c.l.b16 %v355
    %v364 = vunpack.c.h.b16 %v352
    %v365 = vunpack.c.h.b16 %v353
    %v366 = vunpack.c.h.b16 %v354
    %v367 = vunpack.c.h.b16 %v355
    %v368 = vpack.c.b16 %v361, %v360
    %v369 = vpack.c.b16 %v363, %v362
    %v370 = vpack.c.b16 %v365, %v364
    %v371 = vpack.c.b16 %v367, %v366
    %376 = vst [vmem:[#allocation7] sm:$0xff] %v368
    %377 = vst [vmem:[#allocation7 + $0x8] sm:$0xff] %v369
    %378 = vst [vmem:[#allocation7 + $0x10] sm:$0xff] %v370
    %379 = vst [vmem:[#allocation7 + $0x18] sm:$0xff] %v371
    // Predicated region
    $region22: #{tpu_custom_call.1} parent=1 // pred_check
      _
    $region23: #{tpu_custom_call.1} parent=1 // pred_check_branch
      %381 = sbr.rel (0) target = $region25
    $region24: #{tpu_custom_call.1} parent=1 // pred_region
      %s383 = ssub.s32 512, 512
      %384 = vsyncadd [#allocation4], %s383
      %s385 = sshll.u32 [#allocation7], 4
      %s386 = int_to_ptr.vmem [resolvable:$true] %s385
      %391 = dma.vmem_to_hbm [thread:$0]  %s386, 512, %s3, [#allocation4], 256, 256, 16
    $region25: #{tpu_custom_call.1} parent=1 // pred_fallthru
      _
    // Predicated region
    $region26: #{tpu_custom_call.1} parent=1 // pred_check
      _
    $region27: #{tpu_custom_call.1} parent=1 // pred_check_branch
      %393 = sbr.rel (0) target = $region29
    $region28: #{tpu_custom_call.1} parent=1 // pred_region
      %394 = dma.done [#allocation4], 512
    $region29: #{tpu_custom_call.1} parent=1 // pred_fallthru
      _
    %395 = vsyncpa [#allocation3], 1
    %396 = vsyncpa [#allocation6], 1
    %397 = vsyncpa [#allocation4], 1

</llo_original>
